<compile_context>
chip_gen: v7x
topology: tpu7x:2x2x1
jax: 0.10.0
libtpu: 0.0.40
codegen_flags: <defaults>
</compile_context>

<pallas_src>
import jax
import jax.numpy as jnp
from jax import lax
from jax.experimental import pallas as pl
from jax.experimental.pallas import tpu as pltpu


def _round_up(x, m):
    return ((x + m - 1) // m) * m


def _cdiv(a, b):
    return -(-a // b)


def _conv_angle_kernel(ang_ref, addlin_ref, addatt_ref, wcomb_ref, seg_ref,
                       bcast_ref, gamma_ref, beta_ref, o_ref):
    # ang_ref    : (TR, L)   packed angle rows, native dtype (L = G*P lanes)
    # addlin_ref : (TR, L)   per-row edge contribution (+ b_lin) to the linear path, f32
    # addatt_ref : (TR, G)   per-row edge contribution (+ b_att) to the attention logit, f32
    # wcomb_ref  : (L, 2L)   [block-diag W_lin_ang | block-diag replicated w_att_ang]
    # seg_ref    : (L, L)    block-diag ones / P   (segmented mean over each P-lane group)
    # bcast_ref  : (G, L)    broadcasts a per-group scalar to its P lanes
    L = ang_ref.shape[-1]
    ang = ang_ref[...]

    # One fused 2L-wide MXU projection: [lin | att].
    proj = jnp.dot(ang, wcomb_ref[...], preferred_element_type=jnp.float32)

    # Gated-linear path (edge terms + bias arrive via the add table).
    lin = proj[:, :L] + addlin_ref[...]

    # Attention logit, replicated across each P-lane group; compact per-row
    # adds expanded to lanes with a tiny (G, L) broadcast matmul.
    att = proj[:, L:] + jnp.dot(addatt_ref[...], bcast_ref[...],
                                preferred_element_type=jnp.float32)
    alpha = jnp.where(att > 0, att, 0.01 * att)          # LeakyReLU(0.01)

    # Residual add.
    z = ang.astype(jnp.float32) + alpha * lin

    # Segmented LayerNorm (eps=1e-5, affine) over each P-lane group.
    # Two *independent* MXU segmented sums; 1/P folded into seg_ref.
    mean = jnp.dot(z, seg_ref[...], preferred_element_type=jnp.float32)
    meansq = jnp.dot(z * z, seg_ref[...], preferred_element_type=jnp.float32)
    var = meansq - mean * mean
    zn = (z - mean) * lax.rsqrt(var + 1e-5)
    zn = zn * gamma_ref[...] + beta_ref[...]

    # Softplus (beta=1, threshold=20), matching torch.nn.Softplus.
    sp = jnp.where(zn > 20.0, zn, jnp.log1p(jnp.exp(jnp.minimum(zn, 20.0))))
    o_ref[...] = sp.astype(o_ref.dtype)


def conv_angle_pallas(angle_fea, edge_fea, nbr_idx, params, *, tile_rows=1024):
    """angle_fea: (N, M, M, P)  edge_fea: (N, M, P)  nbr_idx: (N, M) int32."""
    N, M, O, P = angle_fea.shape
    assert O == M
    assert edge_fea.shape == (N, M, P)
    f32 = jnp.float32
    hi = lax.Precision.HIGHEST

    w_att, b_att, w_lin, b_lin, gamma, beta = params

    # ---- split the 3P weights into [ij | ik | angle] blocks -----------------
    w_att_ij, w_att_ik, w_att_ang = w_att[:P], w_att[P:2 * P], w_att[2 * P:]
    w_lin_ij, w_lin_ik, w_lin_ang = w_lin[:P], w_lin[P:2 * P], w_lin[2 * P:]

    # ---- project the N*M distinct edge rows once (tiny matmuls, plain JAX) --
    edge2 = edge_fea.reshape(N * M, P).astype(f32)
    pre_lin_ij = jnp.dot(edge2, w_lin_ij.astype(f32), precision=hi).reshape(N, M, P)
    pre_lin_ik = jnp.dot(edge2, w_lin_ik.astype(f32), precision=hi).reshape(N, M, P)
    pre_att_ij = jnp.dot(edge2, w_att_ij.astype(f32), precision=hi).reshape(N, M, 1)
    pre_att_ik = jnp.dot(edge2, w_att_ik.astype(f32), precision=hi).reshape(N, M, 1)

    # Per-output-row additive tables (one XLA gather fusion; biases folded in).
    # The attention table stays compact: 1 scalar per output row.
    add_lin = pre_lin_ij[:, :, None, :] + pre_lin_ik[nbr_idx] + b_lin.astype(f32)  # (N,M,M,P)
    add_att = pre_att_ij[:, :, None, :] + pre_att_ik[nbr_idx] + b_att.astype(f32)  # (N,M,M,1)

    # ---- lane-dense packing: pure reshape views, no pad / extra copies ------
    R = N * M * M
    G = 128 // P if (P < 128 and 128 % P == 0 and R % (128 // P) == 0) else 1
    L = G * P
    rp = R // G

    ang_p = angle_fea.reshape(rp, L)       # native dtype
    addlin_p = add_lin.reshape(rp, L)      # f32
    addatt_p = add_att.reshape(rp, G)      # f32

    # Tile: large (amortize ~0.35us/step), multiple of 8, but keep >= 2 grid
    # steps so the "parallel" axis can shard across both TensorCores on v7x.
    tr = max(8, min(_round_up(tile_rows, 8), _round_up(_cdiv(rp, 2), 8)))
    grid = (_cdiv(rp, tr),)

    # ---- block-diagonal weights / helpers for the packed layout -------------
    eye_g = jnp.eye(G, dtype=f32)
    w_lin_blk = jnp.kron(eye_g, w_lin_ang.astype(f32))                        # (L, L)
    w_att_blk = jnp.kron(eye_g, jnp.tile(w_att_ang.astype(f32), (1, P)))      # (L, L)
    w_comb = jnp.concatenate([w_lin_blk, w_att_blk], axis=1)                  # (L, 2L)
    seg_mean = jnp.kron(eye_g, jnp.full((P, P), 1.0 / P, f32))                # (L, L)
    bcast_g = jnp.kron(eye_g, jnp.ones((1, P), f32))                          # (G, L)
    gamma_t = jnp.tile(gamma.astype(f32), G).reshape(1, L)
    beta_t = jnp.tile(beta.astype(f32), G).reshape(1, L)

    # Stream activations in native dtype; give bf16 inputs a native bf16 MXU
    # projection (f32 inputs keep an f32 projection for accuracy).
    if angle_fea.dtype == jnp.bfloat16:
        w_comb = w_comb.astype(jnp.bfloat16)

    rep = lambda i: (0, 0)   # replicated (full-array) blocks; fetched once

    out = pl.pallas_call(
        _conv_angle_kernel,
        out_shape=jax.ShapeDtypeStruct((rp, L), angle_fea.dtype),
        grid_spec=pltpu.PrefetchScalarGridSpec(
            num_scalar_prefetch=0,
            grid=grid,
            in_specs=[
                pl.BlockSpec((tr, L), lambda i: (i, 0)),   # packed angle rows
                pl.BlockSpec((tr, L), lambda i: (i, 0)),   # packed lin-add table
                pl.BlockSpec((tr, G), lambda i: (i, 0)),   # compact att-add (1 scalar/row)
                pl.BlockSpec((L, 2 * L), rep),             # fused [W_lin | W_att] block-diag
                pl.BlockSpec((L, L), rep),                 # segmented-mean matrix (1/P folded)
                pl.BlockSpec((G, L), rep),                 # per-group lane broadcast
                pl.BlockSpec((1, L), rep),                 # LN gamma (lane-tiled)
                pl.BlockSpec((1, L), rep),                 # LN beta  (lane-tiled)
            ],
            out_specs=pl.BlockSpec((tr, L), lambda i: (i, 0)),
        ),
        compiler_params=pltpu.CompilerParams(
            dimension_semantics=("parallel",),
            vmem_limit_bytes=32 * 1024 * 1024),
    )(ang_p, addlin_p, addatt_p, w_comb, seg_mean, bcast_g, gamma_t, beta_t)

    return out.reshape(N, M, M, P)


def _reference(angle_fea, edge_fea, nbr_idx, params):
    """Pure-JAX reference mirroring the PyTorch forward (concat formulation)."""
    N, M, O, P = angle_fea.shape
    w_att, b_att, w_lin, b_lin, gamma, beta = params
    hi = lax.Precision.HIGHEST
    eij = jnp.broadcast_to(edge_fea[:, :, None, :], (N, M, M, P))
    eik = edge_fea[nbr_idx]
    cat = jnp.concatenate([eij, eik, angle_fea], axis=-1)
    att = jnp.dot(cat, w_att, precision=hi) + b_att
    alpha = jnp.where(att > 0, att, 0.01 * att)
    y = alpha * (jnp.dot(cat, w_lin, precision=hi) + b_lin)
    z = angle_fea + y
    mean = z.mean(-1, keepdims=True)
    var = ((z - mean) ** 2).mean(-1, keepdims=True)
    zn = (z - mean) / jnp.sqrt(var + 1e-5) * gamma + beta
    return jnp.where(zn > 20.0, zn, jnp.log1p(jnp.exp(jnp.minimum(zn, 20.0))))


if __name__ == "__main__":
    # Small shapes consistent with the forward: angle_fea (N, M, M, P),
    # edge_fea (N, M, P), nbr_idx (N, M); edge_fea_len == angle_fea_len == P.
    N, M, P = 4, 8, 32
    key = jax.random.PRNGKey(0)
    k1, k2, k3, k4, k5, k6, k7 = jax.random.split(key, 7)

    angle_fea = jax.random.normal(k1, (N, M, M, P), jnp.float32)
    edge_fea = jax.random.normal(k2, (N, M, P), jnp.float32)
    nbr_idx = jax.random.randint(k3, (N, M), 0, N, jnp.int32)

    # Deterministic synthetic parameters (shapes per nn.Linear / nn.LayerNorm).
    in_dim = 3 * P
    scale = 1.0 / jnp.sqrt(jnp.float32(in_dim))
    w_att = jax.random.uniform(k4, (in_dim, 1), jnp.float32, -scale, scale)
    b_att = jax.random.uniform(k5, (1,), jnp.float32, -scale, scale)
    w_lin = jax.random.uniform(k6, (in_dim, P), jnp.float32, -scale, scale)
    b_lin = jax.random.uniform(k7, (P,), jnp.float32, -scale, scale)
    gamma = jnp.ones((P,), jnp.float32)
    beta = jnp.zeros((P,), jnp.float32)
    params = (w_att, b_att, w_lin, b_lin, gamma, beta)

    out = jax.block_until_ready(
        jax.jit(conv_angle_pallas)(angle_fea, edge_fea, nbr_idx, params))
    ref = _reference(angle_fea, edge_fea, nbr_idx, params)

    assert out.shape == (N, M, M, P)
    assert jnp.allclose(out, ref, atol=1e-4, rtol=1e-4), (
        float(jnp.max(jnp.abs(out - ref))))
    print("KERNEL_OK")
</pallas_src>

<mosaic_0001>
module attributes {stable_mosaic.version = 11 : i64} {
  func.func @_conv_angle_kernel(%arg0: i32, %arg1: memref<32x128xf32, #tpu.memory_space<vmem>>, %arg2: memref<32x128xf32, #tpu.memory_space<vmem>>, %arg3: memref<32x4xf32, #tpu.memory_space<vmem>>, %arg4: memref<128x256xf32, #tpu.memory_space<vmem>>, %arg5: memref<128x128xf32, #tpu.memory_space<vmem>>, %arg6: memref<4x128xf32, #tpu.memory_space<vmem>>, %arg7: memref<1x128xf32, #tpu.memory_space<vmem>>, %arg8: memref<1x128xf32, #tpu.memory_space<vmem>>, %arg9: memref<32x128xf32, #tpu.memory_space<vmem>>) attributes {dimension_semantics = [#tpu.dimension_semantics<parallel>], iteration_bounds = array<i64: 2>, scalar_prefetch = 0 : i64, scratch_operands = 0 : i64, tpu.core_type = #tpu.core_type<tc>, window_params = [{transform_indices = @transform_0, window_bounds = array<i64: 32, 128>}, {transform_indices = @transform_1, window_bounds = array<i64: 32, 128>}, {transform_indices = @transform_2, window_bounds = array<i64: 32, 4>}, {pipeline_mode = #tpu.pipeline_mode<synchronous>, transform_indices = @transform_3, window_bounds = array<i64: 128, 256>}, {pipeline_mode = #tpu.pipeline_mode<synchronous>, transform_indices = @transform_4, window_bounds = array<i64: 128, 128>}, {pipeline_mode = #tpu.pipeline_mode<synchronous>, transform_indices = @transform_5, window_bounds = array<i64: 4, 128>}, {pipeline_mode = #tpu.pipeline_mode<synchronous>, transform_indices = @transform_6, window_bounds = array<i64: 1, 128>}, {pipeline_mode = #tpu.pipeline_mode<synchronous>, transform_indices = @transform_7, window_bounds = array<i64: 1, 128>}, {transform_indices = @transform_8, window_bounds = array<i64: 32, 128>}]} {
    %c0 = arith.constant 0 : index
    %c0_0 = arith.constant 0 : index
    %0 = vector.load %arg1[%c0, %c0_0] : memref<32x128xf32, #tpu.memory_space<vmem>>, vector<32x128xf32>
    %c0_1 = arith.constant 0 : index
    %c0_2 = arith.constant 0 : index
    %1 = vector.load %arg4[%c0_1, %c0_2] : memref<128x256xf32, #tpu.memory_space<vmem>>, vector<128x256xf32>
    %cst = arith.constant dense<0.000000e+00> : vector<32x256xf32>
    %2 = tpu.matmul %0, %1, %cst {dimension_numbers = #tpu.dot_dimension_numbers<[1], [0], [0], [1], [0, 0, 1, 1], [], []>} : vector<32x128xf32>, vector<128x256xf32>, vector<32x256xf32> -> vector<32x256xf32>
    %3 = vector.extract_strided_slice %2 {offsets = [0, 0], sizes = [32, 128], strides = [1, 1]} : vector<32x256xf32> to vector<32x128xf32>
    %c0_3 = arith.constant 0 : index
    %c0_4 = arith.constant 0 : index
    %4 = vector.load %arg2[%c0_3, %c0_4] : memref<32x128xf32, #tpu.memory_space<vmem>>, vector<32x128xf32>
    %5 = arith.addf %3, %4 : vector<32x128xf32>
    %6 = vector.extract_strided_slice %2 {offsets = [0, 128], sizes = [32, 128], strides = [1, 1]} : vector<32x256xf32> to vector<32x128xf32>
    %c0_5 = arith.constant 0 : index
    %c0_6 = arith.constant 0 : index
    %7 = vector.load %arg3[%c0_5, %c0_6] : memref<32x4xf32, #tpu.memory_space<vmem>>, vector<32x4xf32>
    %c0_7 = arith.constant 0 : index
    %c0_8 = arith.constant 0 : index
    %8 = vector.load %arg6[%c0_7, %c0_8] : memref<4x128xf32, #tpu.memory_space<vmem>>, vector<4x128xf32>
    %cst_9 = arith.constant dense<0.000000e+00> : vector<32x128xf32>
    %9 = tpu.matmul %7, %8, %cst_9 {dimension_numbers = #tpu.dot_dimension_numbers<[1], [0], [0], [1], [0, 0, 1, 1], [], []>} : vector<32x4xf32>, vector<4x128xf32>, vector<32x128xf32> -> vector<32x128xf32>
    %10 = arith.addf %6, %9 : vector<32x128xf32>
    %cst_10 = arith.constant 0.000000e+00 : f32
    %11 = vector.broadcast %cst_10 : f32 to vector<32x128xf32>
    %12 = arith.cmpf ogt, %10, %11 : vector<32x128xf32>
    %cst_11 = arith.constant 0.00999999977 : f32
    %13 = vector.broadcast %cst_11 : f32 to vector<32x128xf32>
    %14 = arith.mulf %13, %10 : vector<32x128xf32>
    %15 = arith.select %12, %10, %14 : vector<32x128xi1>, vector<32x128xf32>
    %16 = arith.mulf %15, %5 : vector<32x128xf32>
    %17 = arith.addf %0, %16 : vector<32x128xf32>
    %c0_12 = arith.constant 0 : index
    %c0_13 = arith.constant 0 : index
    %18 = vector.load %arg5[%c0_12, %c0_13] : memref<128x128xf32, #tpu.memory_space<vmem>>, vector<128x128xf32>
    %cst_14 = arith.constant dense<0.000000e+00> : vector<32x128xf32>
    %19 = tpu.matmul %17, %18, %cst_14 {dimension_numbers = #tpu.dot_dimension_numbers<[1], [0], [0], [1], [0, 0, 1, 1], [], []>} : vector<32x128xf32>, vector<128x128xf32>, vector<32x128xf32> -> vector<32x128xf32>
    %20 = arith.mulf %17, %17 : vector<32x128xf32>
    %c0_15 = arith.constant 0 : index
    %c0_16 = arith.constant 0 : index
    %21 = vector.load %arg5[%c0_15, %c0_16] : memref<128x128xf32, #tpu.memory_space<vmem>>, vector<128x128xf32>
    %cst_17 = arith.constant dense<0.000000e+00> : vector<32x128xf32>
    %22 = tpu.matmul %20, %21, %cst_17 {dimension_numbers = #tpu.dot_dimension_numbers<[1], [0], [0], [1], [0, 0, 1, 1], [], []>} : vector<32x128xf32>, vector<128x128xf32>, vector<32x128xf32> -> vector<32x128xf32>
    %23 = arith.mulf %19, %19 : vector<32x128xf32>
    %24 = arith.subf %22, %23 : vector<32x128xf32>
    %25 = arith.subf %17, %19 : vector<32x128xf32>
    %cst_18 = arith.constant 9.99999974E-6 : f32
    %26 = vector.broadcast %cst_18 : f32 to vector<32x128xf32>
    %27 = arith.addf %24, %26 : vector<32x128xf32>
    %28 = math.rsqrt %27 : vector<32x128xf32>
    %29 = arith.mulf %25, %28 : vector<32x128xf32>
    %c0_19 = arith.constant 0 : index
    %c0_20 = arith.constant 0 : index
    %30 = vector.load %arg7[%c0_19, %c0_20] : memref<1x128xf32, #tpu.memory_space<vmem>>, vector<1x128xf32>
    %31 = vector.broadcast %30 : vector<1x128xf32> to vector<32x128xf32>
    %32 = arith.mulf %29, %31 : vector<32x128xf32>
    %c0_21 = arith.constant 0 : index
    %c0_22 = arith.constant 0 : index
    %33 = vector.load %arg8[%c0_21, %c0_22] : memref<1x128xf32, #tpu.memory_space<vmem>>, vector<1x128xf32>
    %34 = vector.broadcast %33 : vector<1x128xf32> to vector<32x128xf32>
    %35 = arith.addf %32, %34 : vector<32x128xf32>
    %cst_23 = arith.constant 2.000000e+01 : f32
    %36 = vector.broadcast %cst_23 : f32 to vector<32x128xf32>
    %37 = arith.cmpf ogt, %35, %36 : vector<32x128xf32>
    %cst_24 = arith.constant 2.000000e+01 : f32
    %38 = vector.broadcast %cst_24 : f32 to vector<32x128xf32>
    %39 = arith.minimumf %35, %38 : vector<32x128xf32>
    %40 = math.exp %39 : vector<32x128xf32>
    %41 = math.log1p %40 : vector<32x128xf32>
    %42 = arith.select %37, %35, %41 : vector<32x128xi1>, vector<32x128xf32>
    %c0_25 = arith.constant 0 : index
    %c0_26 = arith.constant 0 : index
    %43 = vector.load %arg9[%c0_25, %c0_26] : memref<32x128xf32, #tpu.memory_space<vmem>>, vector<32x128xf32>
    tpu.vector_store %arg9[%c0_25, %c0_26], %42 {strides = array<i32>} : memref<32x128xf32, #tpu.memory_space<vmem>>, vector<32x128xf32>,
    return
  }
  func.func @transform_0(%arg0: i32) -> (i32, i32) {
    %c0_i32 = arith.constant 0 : i32
    %c0_i32_0 = arith.constant 0 : i32
    return %arg0, %c0_i32 : i32, i32
  }
  func.func @transform_1(%arg0: i32) -> (i32, i32) {
    %c0_i32 = arith.constant 0 : i32
    %c0_i32_0 = arith.constant 0 : i32
    return %arg0, %c0_i32 : i32, i32
  }
  func.func @transform_2(%arg0: i32) -> (i32, i32) {
    %c0_i32 = arith.constant 0 : i32
    %c0_i32_0 = arith.constant 0 : i32
    return %arg0, %c0_i32 : i32, i32
  }
  func.func @transform_3(%arg0: i32) -> (i32, i32) {
    %c0_i32 = arith.constant 0 : i32
    %c0_i32_0 = arith.constant 0 : i32
    %c0_i32_1 = arith.constant 0 : i32
    return %c0_i32, %c0_i32_0 : i32, i32
  }
  func.func @transform_4(%arg0: i32) -> (i32, i32) {
    %c0_i32 = arith.constant 0 : i32
    %c0_i32_0 = arith.constant 0 : i32
    %c0_i32_1 = arith.constant 0 : i32
    return %c0_i32, %c0_i32_0 : i32, i32
  }
  func.func @transform_5(%arg0: i32) -> (i32, i32) {
    %c0_i32 = arith.constant 0 : i32
    %c0_i32_0 = arith.constant 0 : i32
    %c0_i32_1 = arith.constant 0 : i32
    return %c0_i32, %c0_i32_0 : i32, i32
  }
  func.func @transform_6(%arg0: i32) -> (i32, i32) {
    %c0_i32 = arith.constant 0 : i32
    %c0_i32_0 = arith.constant 0 : i32
    %c0_i32_1 = arith.constant 0 : i32
    return %c0_i32, %c0_i32_0 : i32, i32
  }
  func.func @transform_7(%arg0: i32) -> (i32, i32) {
    %c0_i32 = arith.constant 0 : i32
    %c0_i32_0 = arith.constant 0 : i32
    %c0_i32_1 = arith.constant 0 : i32
    return %c0_i32, %c0_i32_0 : i32, i32
  }
  func.func @transform_8(%arg0: i32) -> (i32, i32) {
    %c0_i32 = arith.constant 0 : i32
    %c0_i32_0 = arith.constant 0 : i32
    return %arg0, %c0_i32 : i32, i32
  }
}

</mosaic_0001>

<llo_original>
// kernel: tile.24
$region0: #{tile.24}
  %s0 = inlined_call_operand.vmem [shape: f32[4,32], index: 0, kind: input, shape index: {}]
  %s1 = inlined_call_operand.vmem [shape: f32[1,128], index: 1, kind: output, shape index: {}]
  $region1: #{tile.24} parent=0
    #allocation0 [shape = 'u8[4096]{0}', space=vmem, size = 0x1000, scoped, tag = 'scoped mem for output reshape']
    #allocation1 [shape = 'u8[4096]{0}', space=vmem, size = 0x1000, scoped, tag = 'scoped mem for input reshape']
    %s3 = sshllo.u32 0, 4
    %v4 = vld [vmem:[%s0] sm:%s3]
    %5 = vst [vmem:[#allocation1] sm:%s3] %v4
    %v6 = vld [vmem:[#allocation1] sm:$0x1]
    %vm7 = vcmask 261120
    %8 = vst.msk [vmem:[#allocation0] sm:$0x1] %vm7, %v6
    %s9 = scalar_lea.vmem [#allocation1], 3
    %v10 = vld [vmem:[%s9] sm:$0x1]
    %11 = vrot.lane.b32.xlu0 %v10, 96
    %v12 = vpop.permute.xlu0 %11
    %vm13 = vcmask 1048320
    %14 = vst.msk [vmem:[#allocation0] sm:$0x1] %vm13, %v12
    %s15 = scalar_lea.vmem [#allocation1], 2
    %v16 = vld [vmem:[%s15] sm:$0x1]
    %17 = vrot.lane.b32.xlu0 %v16, 64
    %v18 = vpop.permute.xlu0 %17
    %vm19 = vcmask 785920
    %20 = vst.msk [vmem:[#allocation0] sm:$0x1] %vm19, %v18
    %s21 = scalar_lea.vmem [#allocation1], 1
    %v22 = vld [vmem:[%s21] sm:$0x1]
    %23 = vrot.lane.b32.xlu0 %v22, 32
    %v24 = vpop.permute.xlu0 %23
    %vm25 = vcmask 523520
    %26 = vst.msk [vmem:[#allocation0] sm:$0x1] %vm25, %v24
    %s28 = sshllo.u32 0, 1
    %v30 = vld [vmem:[#allocation0] sm:%s28]
    %s31 = sshllo.u32 0, 1
    %32 = vst [vmem:[%s1] sm:%s31] %v30

// kernel: conv_angle_pallas.1
$region0: #{conv_angle_pallas.1}
  #allocation0 [shape = 'u32[]', space=smem, size = 0x4, offset = 0x4, fixed_abs, tag = 'smem constant byte address 0x4 - core index']
  #allocation1 [shape = 'u32[144,128]{1,0:T(1,128)}', space=vmem, size = 0x12000, scoped, tag = 'internal scratch']
  %s0 = inlined_call_operand.vmem [shape: f32[64,128], index: 0, kind: input, shape index: {}]
  %s1 = inlined_call_operand.vmem [shape: f32[64,128], index: 1, kind: input, shape index: {}]
  %s2 = inlined_call_operand.vmem [shape: f32[64,4], index: 2, kind: input, shape index: {}]
  %s3 = inlined_call_operand.vmem [shape: f32[128,256], index: 3, kind: input, shape index: {}]
  %s4 = inlined_call_operand.vmem [shape: f32[128,128], index: 4, kind: input, shape index: {}]
  %s5 = inlined_call_operand.vmem [shape: f32[4,128], index: 5, kind: input, shape index: {}]
  %s6 = inlined_call_operand.vmem [shape: f32[1,128], index: 6, kind: input, shape index: {}]
  %s7 = inlined_call_operand.vmem [shape: f32[1,128], index: 7, kind: input, shape index: {}]
  %s8 = inlined_call_operand.vmem [shape: f32[64,128], index: 8, kind: output, shape index: {}]
  %s9 = sld [smem:[#allocation0]]
  $region65: #{conv_angle_pallas.1} parent=0
    _
  %s11 = ssub.s32 1, %s9
  %s12 = scalar_select 0, %s11, %s9
  loop: start=0, step=1, limit=4
  $region2: #{conv_angle_pallas.1} parent=0 // loop_pre_header
    _
  $region3: #{conv_angle_pallas.1} parent=0 // loop_header
    %s14 = sphi 0, %s18
    %p15 = scmp.ge.s32.totalorder %s14, 4
    %s24 = sphi 0, %s26
    %s27 = sphi 0, %s24
    %s28 = sphi 0, %s27
    %s44 = sphi 0, %s28
    %s50 = sphi 0, %s52
    %s53 = sphi 0, %s50
    %s54 = sphi 0, %s53
    %s70 = sphi 0, %s54
    %s76 = sphi 0, %s78
    %s79 = sphi 0, %s76
    %s80 = sphi 0, %s79
    %s96 = sphi 0, %s80
    %s100 = sphi 0, %s100
    %s102 = sphi 0, %s100
    %s103 = sphi 0, %s102
    %s117 = sphi 0, %s103
    %s121 = sphi 0, %s121
    %s123 = sphi 0, %s121
    %s124 = sphi 0, %s123
    %s138 = sphi 0, %s124
    %s142 = sphi 0, %s142
    %s144 = sphi 0, %s142
    %s145 = sphi 0, %s144
    %s159 = sphi 0, %s145
    %s163 = sphi 0, %s163
    %s165 = sphi 0, %s163
    %s166 = sphi 0, %s165
    %s180 = sphi 0, %s166
    %s184 = sphi 0, %s184
    %s186 = sphi 0, %s184
    %s187 = sphi 0, %s186
    %s201 = sphi 0, %s187
    %s207 = sphi 0, %s209
    %s210 = sphi 0, %s207
    %s211 = sphi 0, %s210
    %s227 = sphi 0, %s211
  $region4: #{conv_angle_pallas.1} parent=0 // loop_header_branch
    %17 = sbr.rel (%p15) target = $region8
  $region5: #{conv_angle_pallas.1} parent=0 // loop_body
    %s19 = ssub.s32 %s14, 1
    %s20 = ssub.s32 %s14, 2
    %s21 = sadd.s32 %s14, 1
    %s22 = ssub.s32 %s14, %s21
    %p23 = scmp.eq.s32.totalorder %s22, 0
    %s25 = sadd.s32 %s24, 1
    %s26 = scalar_select %p23, %s24, %s25
    %p29 = pneg %p23
    %p30 = scmp.eq.s32.totalorder %s14, 1
    %p31 = por %p29, %p30
    %p32 = scmp.ne.s32.totalorder %s24, %s27
    %p33 = scmp.eq.s32.totalorder %s14, 0
    %p34 = por %p32, %p33
    %p35 = scmp.ne.s32.totalorder %s24, %s27
    %p36 = scmp.eq.s32.totalorder %s19, 1
    %p37 = por %p35, %p36
    %p38 = scmp.ne.s32.totalorder %s27, %s28
    %p39 = scmp.eq.s32.totalorder %s19, 0
    %p40 = por %p38, %p39
    %p41 = scmp.ne.s32.totalorder %s27, %s28
    %p42 = scmp.eq.s32.totalorder %s20, 1
    %p43 = por %p41, %p42
    %p45 = scmp.ne.s32.totalorder %s28, %s44
    %p46 = scmp.eq.s32.totalorder %s20, 0
    %p47 = por %p45, %p46
    %s48 = ssub.s32 %s14, %s21
    %p49 = scmp.eq.s32.totalorder %s48, 0
    %s51 = sadd.s32 %s50, 1
    %s52 = scalar_select %p49, %s50, %s51
    %p55 = pneg %p49
    %p56 = scmp.eq.s32.totalorder %s14, 1
    %p57 = por %p55, %p56
    %p58 = scmp.ne.s32.totalorder %s50, %s53
    %p59 = scmp.eq.s32.totalorder %s14, 0
    %p60 = por %p58, %p59
    %p61 = scmp.ne.s32.totalorder %s50, %s53
    %p62 = scmp.eq.s32.totalorder %s19, 1
    %p63 = por %p61, %p62
    %p64 = scmp.ne.s32.totalorder %s53, %s54
    %p65 = scmp.eq.s32.totalorder %s19, 0
    %p66 = por %p64, %p65
    %p67 = scmp.ne.s32.totalorder %s53, %s54
    %p68 = scmp.eq.s32.totalorder %s20, 1
    %p69 = por %p67, %p68
    %p71 = scmp.ne.s32.totalorder %s54, %s70
    %p72 = scmp.eq.s32.totalorder %s20, 0
    %p73 = por %p71, %p72
    %s74 = ssub.s32 %s14, %s21
    %p75 = scmp.eq.s32.totalorder %s74, 0
    %s77 = sadd.s32 %s76, 1
    %s78 = scalar_select %p75, %s76, %s77
    %p81 = pneg %p75
    %p82 = scmp.eq.s32.totalorder %s14, 1
    %p83 = por %p81, %p82
    %p84 = scmp.ne.s32.totalorder %s76, %s79
    %p85 = scmp.eq.s32.totalorder %s14, 0
    %p86 = por %p84, %p85
    %p87 = scmp.ne.s32.totalorder %s76, %s79
    %p88 = scmp.eq.s32.totalorder %s19, 1
    %p89 = por %p87, %p88
    %p90 = scmp.ne.s32.totalorder %s79, %s80
    %p91 = scmp.eq.s32.totalorder %s19, 0
    %p92 = por %p90, %p91
    %p93 = scmp.ne.s32.totalorder %s79, %s80
    %p94 = scmp.eq.s32.totalorder %s20, 1
    %p95 = por %p93, %p94
    %p97 = scmp.ne.s32.totalorder %s80, %s96
    %p98 = scmp.eq.s32.totalorder %s20, 0
    %p99 = por %p97, %p98
    %s101 = sadd.s32 %s100, 1
    %p104 = scmp.eq.s32.totalorder %s14, 1
    %p105 = scmp.ne.s32.totalorder %s100, %s102
    %p106 = scmp.eq.s32.totalorder %s14, 0
    %p107 = por %p105, %p106
    %p108 = scmp.ne.s32.totalorder %s100, %s102
    %p109 = scmp.eq.s32.totalorder %s19, 1
    %p110 = por %p108, %p109
    %p111 = scmp.ne.s32.totalorder %s102, %s103
    %p112 = scmp.eq.s32.totalorder %s19, 0
    %p113 = por %p111, %p112
    %p114 = scmp.ne.s32.totalorder %s102, %s103
    %p115 = scmp.eq.s32.totalorder %s20, 1
    %p116 = por %p114, %p115
    %p118 = scmp.ne.s32.totalorder %s103, %s117
    %p119 = scmp.eq.s32.totalorder %s20, 0
    %p120 = por %p118, %p119
    %s122 = sadd.s32 %s121, 1
    %p125 = scmp.eq.s32.totalorder %s14, 1
    %p126 = scmp.ne.s32.totalorder %s121, %s123
    %p127 = scmp.eq.s32.totalorder %s14, 0
    %p128 = por %p126, %p127
    %p129 = scmp.ne.s32.totalorder %s121, %s123
    %p130 = scmp.eq.s32.totalorder %s19, 1
    %p131 = por %p129, %p130
    %p132 = scmp.ne.s32.totalorder %s123, %s124
    %p133 = scmp.eq.s32.totalorder %s19, 0
    %p134 = por %p132, %p133
    %p135 = scmp.ne.s32.totalorder %s123, %s124
    %p136 = scmp.eq.s32.totalorder %s20, 1
    %p137 = por %p135, %p136
    %p139 = scmp.ne.s32.totalorder %s124, %s138
    %p140 = scmp.eq.s32.totalorder %s20, 0
    %p141 = por %p139, %p140
    %s143 = sadd.s32 %s142, 1
    %p146 = scmp.eq.s32.totalorder %s14, 1
    %p147 = scmp.ne.s32.totalorder %s142, %s144
    %p148 = scmp.eq.s32.totalorder %s14, 0
    %p149 = por %p147, %p148
    %p150 = scmp.ne.s32.totalorder %s142, %s144
    %p151 = scmp.eq.s32.totalorder %s19, 1
    %p152 = por %p150, %p151
    %p153 = scmp.ne.s32.totalorder %s144, %s145
    %p154 = scmp.eq.s32.totalorder %s19, 0
    %p155 = por %p153, %p154
    %p156 = scmp.ne.s32.totalorder %s144, %s145
    %p157 = scmp.eq.s32.totalorder %s20, 1
    %p158 = por %p156, %p157
    %p160 = scmp.ne.s32.totalorder %s145, %s159
    %p161 = scmp.eq.s32.totalorder %s20, 0
    %p162 = por %p160, %p161
    %s164 = sadd.s32 %s163, 1
    %p167 = scmp.eq.s32.totalorder %s14, 1
    %p168 = scmp.ne.s32.totalorder %s163, %s165
    %p169 = scmp.eq.s32.totalorder %s14, 0
    %p170 = por %p168, %p169
    %p171 = scmp.ne.s32.totalorder %s163, %s165
    %p172 = scmp.eq.s32.totalorder %s19, 1
    %p173 = por %p171, %p172
    %p174 = scmp.ne.s32.totalorder %s165, %s166
    %p175 = scmp.eq.s32.totalorder %s19, 0
    %p176 = por %p174, %p175
    %p177 = scmp.ne.s32.totalorder %s165, %s166
    %p178 = scmp.eq.s32.totalorder %s20, 1
    %p179 = por %p177, %p178
    %p181 = scmp.ne.s32.totalorder %s166, %s180
    %p182 = scmp.eq.s32.totalorder %s20, 0
    %p183 = por %p181, %p182
    %s185 = sadd.s32 %s184, 1
    %p188 = scmp.eq.s32.totalorder %s14, 1
    %p189 = scmp.ne.s32.totalorder %s184, %s186
    %p190 = scmp.eq.s32.totalorder %s14, 0
    %p191 = por %p189, %p190
    %p192 = scmp.ne.s32.totalorder %s184, %s186
    %p193 = scmp.eq.s32.totalorder %s19, 1
    %p194 = por %p192, %p193
    %p195 = scmp.ne.s32.totalorder %s186, %s187
    %p196 = scmp.eq.s32.totalorder %s19, 0
    %p197 = por %p195, %p196
    %p198 = scmp.ne.s32.totalorder %s186, %s187
    %p199 = scmp.eq.s32.totalorder %s20, 1
    %p200 = por %p198, %p199
    %p202 = scmp.ne.s32.totalorder %s187, %s201
    %p203 = scmp.eq.s32.totalorder %s20, 0
    %p204 = por %p202, %p203
    %s205 = ssub.s32 %s14, %s21
    %p206 = scmp.eq.s32.totalorder %s205, 0
    %s208 = sadd.s32 %s207, 1
    %s209 = scalar_select %p206, %s207, %s208
    %p212 = pneg %p206
    %p213 = scmp.eq.s32.totalorder %s14, 1
    %p214 = por %p212, %p213
    %p215 = scmp.ne.s32.totalorder %s207, %s210
    %p216 = scmp.eq.s32.totalorder %s14, 0
    %p217 = por %p215, %p216
    %p218 = scmp.ne.s32.totalorder %s207, %s210
    %p219 = scmp.eq.s32.totalorder %s19, 1
    %p220 = por %p218, %p219
    %p221 = scmp.ne.s32.totalorder %s210, %s211
    %p222 = scmp.eq.s32.totalorder %s19, 0
    %p223 = por %p221, %p222
    %p224 = scmp.ne.s32.totalorder %s210, %s211
    %p225 = scmp.eq.s32.totalorder %s20, 1
    %p226 = por %p224, %p225
    %p228 = scmp.ne.s32.totalorder %s211, %s227
    %p229 = scmp.eq.s32.totalorder %s20, 0
    %p230 = por %p228, %p229
    %p231 = scmp.le.s32.totalorder 1, %s14
    %p232 = scmp.lt.s32.totalorder %s14, 3
    %p233 = pnand %p231, %p232
    %p234 = pneg %p233
    // Predicated region
    $region9: #{conv_angle_pallas.1} parent=5 // pred_check
      _
    $region10: #{conv_angle_pallas.1} parent=5 // pred_check_branch
      %236 = sbr.rel (%p233) target = $region12
    $region11: #{conv_angle_pallas.1} parent=5 // pred_region
      %s237 = ssub.s32 %s14, 1
      // Predicated region
      $region13: #{conv_angle_pallas.1} parent=11 // pred_check
        %p238 = pneg %p113
      $region14: #{conv_angle_pallas.1} parent=11 // pred_check_branch
        %240 = sbr.rel (%p238) target = $region16
      $region15: #{conv_angle_pallas.1} parent=11 // pred_region
        _
      $region16: #{conv_angle_pallas.1} parent=11 // pred_fallthru
        _
      // Predicated region
      $region17: #{conv_angle_pallas.1} parent=11 // pred_check
        %p241 = pneg %p134
      $region18: #{conv_angle_pallas.1} parent=11 // pred_check_branch
        %243 = sbr.rel (%p241) target = $region20
      $region19: #{conv_angle_pallas.1} parent=11 // pred_region
        _
      $region20: #{conv_angle_pallas.1} parent=11 // pred_fallthru
        _
      // Predicated region
      $region21: #{conv_angle_pallas.1} parent=11 // pred_check
        %p244 = pneg %p155
      $region22: #{conv_angle_pallas.1} parent=11 // pred_check_branch
        %246 = sbr.rel (%p244) target = $region24
      $region23: #{conv_angle_pallas.1} parent=11 // pred_region
        _
      $region24: #{conv_angle_pallas.1} parent=11 // pred_fallthru
        _
      // Predicated region
      $region25: #{conv_angle_pallas.1} parent=11 // pred_check
        %p247 = pneg %p176
      $region26: #{conv_angle_pallas.1} parent=11 // pred_check_branch
        %249 = sbr.rel (%p247) target = $region28
      $region27: #{conv_angle_pallas.1} parent=11 // pred_region
        _
      $region28: #{conv_angle_pallas.1} parent=11 // pred_fallthru
        _
      // Predicated region
      $region29: #{conv_angle_pallas.1} parent=11 // pred_check
        %p250 = pneg %p197
      $region30: #{conv_angle_pallas.1} parent=11 // pred_check_branch
        %252 = sbr.rel (%p250) target = $region32
      $region31: #{conv_angle_pallas.1} parent=11 // pred_region
        _
      $region32: #{conv_angle_pallas.1} parent=11 // pred_fallthru
        _
    $region12: #{conv_angle_pallas.1} parent=5 // pred_fallthru
      _
    %p253 = scmp.lt.s32.totalorder %s14, 2
    // Predicated region
    $region33: #{conv_angle_pallas.1} parent=5 // pred_check
      %p254 = pneg %p253
    $region34: #{conv_angle_pallas.1} parent=5 // pred_check_branch
      %256 = sbr.rel (%p254) target = $region36
    $region35: #{conv_angle_pallas.1} parent=5 // pred_region
      // Predicated region
      $region37: #{conv_angle_pallas.1} parent=35 // pred_check
        %p257 = pneg %p34
      $region38: #{conv_angle_pallas.1} parent=35 // pred_check_branch
        %259 = sbr.rel (%p257) target = $region40
      $region39: #{conv_angle_pallas.1} parent=35 // pred_region
        %s260 = smul.u32 4, %s14
        %p261 = scmp.lt.s32.totalorder %s260, 7
        %s262 = scalar_select %p261, %s260, 7
        %s263 = smul.addr %s262, 8
        %s264 = scalar_lea.vmem %s0, %s263
        %s265 = smul.u32 4, %s14
      $region40: #{conv_angle_pallas.1} parent=35 // pred_fallthru
        _
      // Predicated region
      $region41: #{conv_angle_pallas.1} parent=35 // pred_check
        %p266 = pneg %p60
      $region42: #{conv_angle_pallas.1} parent=35 // pred_check_branch
        %268 = sbr.rel (%p266) target = $region44
      $region43: #{conv_angle_pallas.1} parent=35 // pred_region
        %s269 = smul.u32 4, %s14
        %p270 = scmp.lt.s32.totalorder %s269, 7
        %s271 = scalar_select %p270, %s269, 7
        %s272 = smul.addr %s271, 8
        %s273 = scalar_lea.vmem %s1, %s272
        %s274 = smul.u32 4, %s14
      $region44: #{conv_angle_pallas.1} parent=35 // pred_fallthru
        _
      // Predicated region
      $region45: #{conv_angle_pallas.1} parent=35 // pred_check
        %p275 = pneg %p86
      $region46: #{conv_angle_pallas.1} parent=35 // pred_check_branch
        %277 = sbr.rel (%p275) target = $region48
      $region47: #{conv_angle_pallas.1} parent=35 // pred_region
        %s278 = smul.u32 4, %s14
        %p279 = scmp.lt.s32.totalorder %s278, 7
        %s280 = scalar_select %p279, %s278, 7
        %s281 = smul.addr %s280, 8
        %s282 = scalar_lea.vmem %s2, %s281
        %s283 = smul.u32 4, %s14
      $region48: #{conv_angle_pallas.1} parent=35 // pred_fallthru
        _
    $region36: #{conv_angle_pallas.1} parent=5 // pred_fallthru
      _
    %p284 = scmp.le.s32.totalorder 1, %s14
    %p285 = scmp.lt.s32.totalorder %s14, 3
    %p286 = pnand %p284, %p285
    %p287 = pneg %p286
    // Predicated region
    $region49: #{conv_angle_pallas.1} parent=5 // pred_check
      _
    $region50: #{conv_angle_pallas.1} parent=5 // pred_check_branch
      %289 = sbr.rel (%p286) target = $region52
    $region51: #{conv_angle_pallas.1} parent=5 // pred_region
      %s290 = ssub.s32 %s14, 1
      %s291 = smul.u32 4, %s19
      %p292 = scmp.lt.s32.totalorder %s291, 7
      %s293 = scalar_select %p292, %s291, 7
      %s294 = smul.addr %s293, 8
      %s295 = scalar_lea.vmem %s0, %s294
      %p296 = pneg %p40
      %p297 = pneg %p37
      %s298 = smul.u32 4, %s19
      %p299 = scmp.lt.s32.totalorder %s298, 7
      %s300 = scalar_select %p299, %s298, 7
      %s301 = smul.addr %s300, 8
      %s302 = scalar_lea.vmem %s1, %s301
      %p303 = pneg %p66
      %p304 = pneg %p63
      %s305 = smul.u32 4, %s19
      %p306 = scmp.lt.s32.totalorder %s305, 7
      %s307 = scalar_select %p306, %s305, 7
      %s308 = smul.addr %s307, 8
      %s309 = scalar_lea.vmem %s2, %s308
      %p310 = pneg %p92
      %p311 = pneg %p89
      %p312 = pneg %p113
      %p313 = pneg %p110
      %p314 = pneg %p134
      %p315 = pneg %p131
      %p316 = pneg %p155
      %p317 = pneg %p152
      %p318 = pneg %p176
      %p319 = pneg %p173
      %p320 = pneg %p197
      %p321 = pneg %p194
      %p322 = pneg %p223
      %p323 = pneg %p220
      %s324 = smul.u32 4, %s19
      %p325 = scmp.lt.s32.totalorder %s324, 7
      %s326 = scalar_select %p325, %s324, 7
      %s327 = smul.addr %s326, 8
      %s328 = scalar_lea.vmem %s8, %s327
      %s329 = smul.u32 4, %s19
      %p330 = scmp.lt.s32.totalorder %s329, 7
      %s331 = scalar_select %p330, %s329, 7
      %s332 = smul.addr %s331, 8
      %s333 = scalar_lea.vmem %s0, %s332
      %s334 = smul.u32 4, %s19
      %s335 = smul.u32 4, %s19
      %p336 = scmp.lt.s32.totalorder %s335, 7
      %s337 = scalar_select %p336, %s335, 7
      %s338 = smul.addr %s337, 8
      %s339 = scalar_lea.vmem %s1, %s338
      %s340 = smul.u32 4, %s19
      %s341 = smul.u32 4, %s19
      %p342 = scmp.lt.s32.totalorder %s341, 7
      %s343 = scalar_select %p342, %s341, 7
      %s344 = smul.addr %s343, 8
      %s345 = scalar_lea.vmem %s2, %s344
      %s346 = smul.u32 4, %s19
      %s347 = smul.u32 4, %s19
      %p348 = scmp.lt.s32.totalorder %s347, 7
      %s349 = scalar_select %p348, %s347, 7
      %s350 = smul.addr %s349, 8
      %s351 = scalar_lea.vmem %s8, %s350
      %s352 = smul.u32 4, %s19
      %v353 = vld [vmem:[%s333] sm:$0xff]
      %v354 = vld [vmem:[%s333 + $0x8] sm:$0xff]
      %v355 = vld [vmem:[%s333 + $0x10] sm:$0xff]
      %v356 = vld [vmem:[%s333 + $0x18] sm:$0xff]
      %v357 = vld [vmem:[%s3] sm:$0xff]
      %v358 = vld [vmem:[%s3 + $0x8] sm:$0xff]
      %v359 = vld [vmem:[%s3 + $0x10] sm:$0xff]
      %v360 = vld [vmem:[%s3 + $0x18] sm:$0xff]
      %v361 = vld [vmem:[%s3 + $0x20] sm:$0xff]
      %v362 = vld [vmem:[%s3 + $0x28] sm:$0xff]
      %v363 = vld [vmem:[%s3 + $0x30] sm:$0xff]
      %v364 = vld [vmem:[%s3 + $0x38] sm:$0xff]
      %v365 = vld [vmem:[%s3 + $0x40] sm:$0xff]
      %v366 = vld [vmem:[%s3 + $0x48] sm:$0xff]
      %v367 = vld [vmem:[%s3 + $0x50] sm:$0xff]
      %v368 = vld [vmem:[%s3 + $0x58] sm:$0xff]
      %v369 = vld [vmem:[%s3 + $0x60] sm:$0xff]
      %v370 = vld [vmem:[%s3 + $0x68] sm:$0xff]
      %v371 = vld [vmem:[%s3 + $0x70] sm:$0xff]
      %v372 = vld [vmem:[%s3 + $0x78] sm:$0xff]
      %v373 = vld [vmem:[%s3 + $0x80] sm:$0xff]
      %v374 = vld [vmem:[%s3 + $0x88] sm:$0xff]
      %v375 = vld [vmem:[%s3 + $0x90] sm:$0xff]
      %v376 = vld [vmem:[%s3 + $0x98] sm:$0xff]
      %v377 = vld [vmem:[%s3 + $0xa0] sm:$0xff]
      %v378 = vld [vmem:[%s3 + $0xa8] sm:$0xff]
      %v379 = vld [vmem:[%s3 + $0xb0] sm:$0xff]
      %v380 = vld [vmem:[%s3 + $0xb8] sm:$0xff]
      %v381 = vld [vmem:[%s3 + $0xc0] sm:$0xff]
      %v382 = vld [vmem:[%s3 + $0xc8] sm:$0xff]
      %v383 = vld [vmem:[%s3 + $0xd0] sm:$0xff]
      %v384 = vld [vmem:[%s3 + $0xd8] sm:$0xff]
      %v385 = vld [vmem:[%s3 + $0xe0] sm:$0xff]
      %v386 = vld [vmem:[%s3 + $0xe8] sm:$0xff]
      %v387 = vld [vmem:[%s3 + $0xf0] sm:$0xff]
      %v388 = vld [vmem:[%s3 + $0xf8] sm:$0xff]
      %389 = vmatprep.subr.mxu0 %v358
      %390 = vmatpush1.msra.mxu0 %v357
      %391 = vmatprep.subr.mxu0 %v360
      %392 = vmatpush1.msra.mxu0 %v359
      %393 = vmatprep.subr.mxu0 %v362
      %394 = vmatpush1.msra.mxu0 %v361
      %395 = vmatprep.subr.mxu0 %v364
      %396 = vmatpush1.msra.mxu0 %v363
      %397 = vmatprep.subr.mxu0 %v366
      %398 = vmatpush1.msra.mxu0 %v365
      %399 = vmatprep.subr.mxu0 %v368
      %400 = vmatpush1.msra.mxu0 %v367
      %401 = vmatprep.subr.mxu0 %v370
      %402 = vmatpush1.msra.mxu0 %v369
      %403 = vmatprep.subr.mxu0 %v372
      %404 = vmatpush1.msra.mxu0 %v371
      %405 = vmatprep.subr.mxu0 %v374
      %406 = vmatpush1.msra.mxu0 %v373
      %407 = vmatprep.subr.mxu0 %v376
      %408 = vmatpush1.msra.mxu0 %v375
      %409 = vmatprep.subr.mxu0 %v378
      %410 = vmatpush1.msra.mxu0 %v377
      %411 = vmatprep.subr.mxu0 %v380
      %412 = vmatpush1.msra.mxu0 %v379
      %413 = vmatprep.subr.mxu0 %v382
      %414 = vmatpush1.msra.mxu0 %v381
      %415 = vmatprep.subr.mxu0 %v384
      %416 = vmatpush1.msra.mxu0 %v383
      %417 = vmatprep.subr.mxu0 %v386
      %418 = vmatpush1.msra.mxu0 %v385
      %419 = vmatprep.subr.mxu0 %v388
      %420 = vmatpush1.msra.mxu0 %v387
      %421 = vmatprep.subr.mxu0 0.0
      %422 = vmatpush1.msra.mxu0 0.0
      %423 = vmatprep.subr.mxu0 0.0
      %424 = vmatpush1.msra.mxu0 0.0
      %425 = vmatprep.subr.mxu0 0.0
      %426 = vmatpush1.msra.mxu0 0.0
      %427 = vmatprep.subr.mxu0 0.0
      %428 = vmatpush1.msra.mxu0 0.0
      %429 = vmatprep.subr.mxu0 0.0
      %430 = vmatpush1.msra.mxu0 0.0
      %431 = vmatprep.subr.mxu0 0.0
      %432 = vmatpush1.msra.mxu0 0.0
      %433 = vmatprep.subr.mxu0 0.0
      %434 = vmatpush1.msra.mxu0 0.0
      %435 = vmatprep.subr.mxu0 0.0
      %436 = vmatpush1.msra.mxu0 0.0
      %437 = vmatprep.subr.mxu0 0.0
      %438 = vmatpush1.msra.mxu0 0.0
      %439 = vmatprep.subr.mxu0 0.0
      %440 = vmatpush1.msra.mxu0 0.0
      %441 = vmatprep.subr.mxu0 0.0
      %442 = vmatpush1.msra.mxu0 0.0
      %443 = vmatprep.subr.mxu0 0.0
      %444 = vmatpush1.msra.mxu0 0.0
      %445 = vmatprep.subr.mxu0 0.0
      %446 = vmatpush1.msra.mxu0 0.0
      %447 = vmatprep.subr.mxu0 0.0
      %448 = vmatpush1.msra.mxu0 0.0
      %449 = vmatprep.subr.mxu0 0.0
      %450 = vmatpush1.msra.mxu0 0.0
      %451 = vmatprep.subr.mxu0 0.0
      %452 = vmatpush1.msra.mxu0 0.0
      %453 = vmatprep.mubr.f32.mxu0 0.0
      %454 = vmatmul.mubr.f32.gmra.mrb[0].mxu0 %v353
      %v455 = vpop.f32.mrb[0].mxu0
      %v456 = vadd.f32 0.0, %v455
      %v457 = vpop.f32.mrb[0].mxu0
      %v458 = vadd.f32 0.0, %v457
      %459 = vmatprep.mubr.f32.mxu0 0.0
      %460 = vmatmul.mubr.f32.gmra.mrb[0].mxu0 %v354
      %v461 = vpop.f32.mrb[0].mxu0
      %v462 = vadd.f32 0.0, %v461
      %v463 = vpop.f32.mrb[0].mxu0
      %v464 = vadd.f32 0.0, %v463
      %465 = vmatprep.mubr.f32.mxu0 0.0
      %466 = vmatmul.mubr.f32.gmra.mrb[0].mxu0 %v355
      %v467 = vpop.f32.mrb[0].mxu0
      %v468 = vadd.f32 0.0, %v467
      %v469 = vpop.f32.mrb[0].mxu0
      %v470 = vadd.f32 0.0, %v469
      %471 = vmatprep.mubr.f32.mxu0 0.0
      %472 = vmatmul.mubr.f32.gmra.mrb[0].mxu0 %v356
      %v473 = vpop.f32.mrb[0].mxu0
      %v474 = vadd.f32 0.0, %v473
      %v475 = vpop.f32.mrb[0].mxu0
      %v476 = vadd.f32 0.0, %v475
      %477 = vdwg.mxu0
      %v478 = vld [vmem:[%s339] sm:$0xff]
      %v479 = vld [vmem:[%s339 + $0x8] sm:$0xff]
      %v480 = vld [vmem:[%s339 + $0x10] sm:$0xff]
      %v481 = vld [vmem:[%s339 + $0x18] sm:$0xff]
      %v482 = vadd.f32 %v456, %v478
      %v483 = vadd.f32 %v462, %v479
      %v484 = vadd.f32 %v468, %v480
      %v485 = vadd.f32 %v474, %v481
      %v486 = vld [vmem:[%s345] sm:$0xff]
      %v487 = vld [vmem:[%s345 + $0x8] sm:$0xff]
      %v488 = vld [vmem:[%s345 + $0x10] sm:$0xff]
      %v489 = vld [vmem:[%s345 + $0x18] sm:$0xff]
      %v490 = vld [vmem:[%s5] sm:$0xf]
      %vm491 = vcmask 31744
      %v493 = vsel %vm491, %v486, 0
      %v496 = vsel %vm491, %v487, 0
      %v499 = vsel %vm491, %v488, 0
      %v502 = vsel %vm491, %v489, 0
      %vm504 = vcmask 1043456
      %v506 = vsel %vm504, %v490, 0
      %508 = vmatprep.subr.mxu0 0.0
      %509 = vmatpush1.msra.mxu0 %v506
      %510 = vmatprep.subr.mxu0 0.0
      %511 = vmatpush1.msra.mxu0 0.0
      %512 = vmatprep.subr.mxu0 0.0
      %513 = vmatpush1.msra.mxu0 0.0
      %514 = vmatprep.subr.mxu0 0.0
      %515 = vmatpush1.msra.mxu0 0.0
      %516 = vmatprep.subr.mxu0 0.0
      %517 = vmatpush1.msra.mxu0 0.0
      %518 = vmatprep.subr.mxu0 0.0
      %519 = vmatpush1.msra.mxu0 0.0
      %520 = vmatprep.subr.mxu0 0.0
      %521 = vmatpush1.msra.mxu0 0.0
      %522 = vmatprep.subr.mxu0 0.0
      %523 = vmatpush1.msra.mxu0 0.0
      %524 = vmatprep.subr.mxu0 0.0
      %525 = vmatpush1.msra.mxu0 0.0
      %526 = vmatprep.subr.mxu0 0.0
      %527 = vmatpush1.msra.mxu0 0.0
      %528 = vmatprep.subr.mxu0 0.0
      %529 = vmatpush1.msra.mxu0 0.0
      %530 = vmatprep.subr.mxu0 0.0
      %531 = vmatpush1.msra.mxu0 0.0
      %532 = vmatprep.subr.mxu0 0.0
      %533 = vmatpush1.msra.mxu0 0.0
      %534 = vmatprep.subr.mxu0 0.0
      %535 = vmatpush1.msra.mxu0 0.0
      %536 = vmatprep.subr.mxu0 0.0
      %537 = vmatpush1.msra.mxu0 0.0
      %538 = vmatprep.subr.mxu0 0.0
      %539 = vmatpush1.msra.mxu0 0.0
      %540 = vmatprep.subr.mxu0 0.0
      %541 = vmatpush1.msra.mxu0 0.0
      %542 = vmatprep.subr.mxu0 0.0
      %543 = vmatpush1.msra.mxu0 0.0
      %544 = vmatprep.subr.mxu0 0.0
      %545 = vmatpush1.msra.mxu0 0.0
      %546 = vmatprep.subr.mxu0 0.0
      %547 = vmatpush1.msra.mxu0 0.0
      %548 = vmatprep.subr.mxu0 0.0
      %549 = vmatpush1.msra.mxu0 0.0
      %550 = vmatprep.subr.mxu0 0.0
      %551 = vmatpush1.msra.mxu0 0.0
      %552 = vmatprep.subr.mxu0 0.0
      %553 = vmatpush1.msra.mxu0 0.0
      %554 = vmatprep.subr.mxu0 0.0
      %555 = vmatpush1.msra.mxu0 0.0
      %556 = vmatprep.subr.mxu0 0.0
      %557 = vmatpush1.msra.mxu0 0.0
      %558 = vmatprep.subr.mxu0 0.0
      %559 = vmatpush1.msra.mxu0 0.0
      %560 = vmatprep.subr.mxu0 0.0
      %561 = vmatpush1.msra.mxu0 0.0
      %562 = vmatprep.subr.mxu0 0.0
      %563 = vmatpush1.msra.mxu0 0.0
      %564 = vmatprep.subr.mxu0 0.0
      %565 = vmatpush1.msra.mxu0 0.0
      %566 = vmatprep.subr.mxu0 0.0
      %567 = vmatpush1.msra.mxu0 0.0
      %568 = vmatprep.subr.mxu0 0.0
      %569 = vmatpush1.msra.mxu0 0.0
      %570 = vmatprep.subr.mxu0 0.0
      %571 = vmatpush1.msra.mxu0 0.0
      %572 = vmatprep.mubr.f32.mxu0 0.0
      %573 = vmatmul.mubr.f32.gmra.mrb[0].mxu0 %v493
      %v574 = vpop.f32.mrb[0].mxu0
      %v575 = vadd.f32 0.0, %v574
      %v576 = vpop.f32.mrb[0].mxu0
      %577 = vmatprep.mubr.f32.mxu0 0.0
      %578 = vmatmul.mubr.f32.gmra.mrb[0].mxu0 %v496
      %v579 = vpop.f32.mrb[0].mxu0
      %v580 = vadd.f32 0.0, %v579
      %v581 = vpop.f32.mrb[0].mxu0
      %582 = vmatprep.mubr.f32.mxu0 0.0
      %583 = vmatmul.mubr.f32.gmra.mrb[0].mxu0 %v499
      %v584 = vpop.f32.mrb[0].mxu0
      %v585 = vadd.f32 0.0, %v584
      %v586 = vpop.f32.mrb[0].mxu0
      %587 = vmatprep.mubr.f32.mxu0 0.0
      %588 = vmatmul.mubr.f32.gmra.mrb[0].mxu0 %v502
      %v589 = vpop.f32.mrb[0].mxu0
      %v590 = vadd.f32 0.0, %v589
      %v591 = vpop.f32.mrb[0].mxu0
      %592 = vdwg.mxu0
      %v593 = vadd.f32 %v458, %v575
      %v594 = vadd.f32 %v464, %v580
      %v595 = vadd.f32 %v470, %v585
      %v596 = vadd.f32 %v476, %v590
      %vm597 = vcmp.gt.f32.partialorder %v593, 0.0
      %vm598 = vcmp.gt.f32.partialorder %v594, 0.0
      %vm599 = vcmp.gt.f32.partialorder %v595, 0.0
      %vm600 = vcmp.gt.f32.partialorder %v596, 0.0
      %v601 = vmul.f32 %v593, 0.01
      %v602 = vmul.f32 %v594, 0.01
      %v603 = vmul.f32 %v595, 0.01
      %v604 = vmul.f32 %v596, 0.01
      %v605 = vsel %vm597, %v593, %v601
      %v606 = vsel %vm598, %v594, %v602
      %v607 = vsel %vm599, %v595, %v603
      %v608 = vsel %vm600, %v596, %v604
      %v609 = vmul.f32 %v605, %v482
      %v610 = vmul.f32 %v606, %v483
      %v611 = vmul.f32 %v607, %v484
      %v612 = vmul.f32 %v608, %v485
      %v613 = vadd.f32 %v353, %v609
      %v614 = vadd.f32 %v354, %v610
      %v615 = vadd.f32 %v355, %v611
      %v616 = vadd.f32 %v356, %v612
      %v617 = vld [vmem:[%s4] sm:$0xff]
      %v618 = vld [vmem:[%s4 + $0x8] sm:$0xff]
      %v619 = vld [vmem:[%s4 + $0x10] sm:$0xff]
      %v620 = vld [vmem:[%s4 + $0x18] sm:$0xff]
      %v621 = vld [vmem:[%s4 + $0x20] sm:$0xff]
      %v622 = vld [vmem:[%s4 + $0x28] sm:$0xff]
      %v623 = vld [vmem:[%s4 + $0x30] sm:$0xff]
      %v624 = vld [vmem:[%s4 + $0x38] sm:$0xff]
      %v625 = vld [vmem:[%s4 + $0x40] sm:$0xff]
      %v626 = vld [vmem:[%s4 + $0x48] sm:$0xff]
      %v627 = vld [vmem:[%s4 + $0x50] sm:$0xff]
      %v628 = vld [vmem:[%s4 + $0x58] sm:$0xff]
      %v629 = vld [vmem:[%s4 + $0x60] sm:$0xff]
      %v630 = vld [vmem:[%s4 + $0x68] sm:$0xff]
      %v631 = vld [vmem:[%s4 + $0x70] sm:$0xff]
      %v632 = vld [vmem:[%s4 + $0x78] sm:$0xff]
      %633 = vmatprep.subr.mxu0 0.0
      %634 = vmatpush1.msra.mxu0 %v617
      %635 = vmatprep.subr.mxu0 0.0
      %636 = vmatpush1.msra.mxu0 %v618
      %637 = vmatprep.subr.mxu0 0.0
      %638 = vmatpush1.msra.mxu0 %v619
      %639 = vmatprep.subr.mxu0 0.0
      %640 = vmatpush1.msra.mxu0 %v620
      %641 = vmatprep.subr.mxu0 0.0
      %642 = vmatpush1.msra.mxu0 %v621
      %643 = vmatprep.subr.mxu0 0.0
      %644 = vmatpush1.msra.mxu0 %v622
      %645 = vmatprep.subr.mxu0 0.0
      %646 = vmatpush1.msra.mxu0 %v623
      %647 = vmatprep.subr.mxu0 0.0
      %648 = vmatpush1.msra.mxu0 %v624
      %649 = vmatprep.subr.mxu0 0.0
      %650 = vmatpush1.msra.mxu0 %v625
      %651 = vmatprep.subr.mxu0 0.0
      %652 = vmatpush1.msra.mxu0 %v626
      %653 = vmatprep.subr.mxu0 0.0
      %654 = vmatpush1.msra.mxu0 %v627
      %655 = vmatprep.subr.mxu0 0.0
      %656 = vmatpush1.msra.mxu0 %v628
      %657 = vmatprep.subr.mxu0 0.0
      %658 = vmatpush1.msra.mxu0 %v629
      %659 = vmatprep.subr.mxu0 0.0
      %660 = vmatpush1.msra.mxu0 %v630
      %661 = vmatprep.subr.mxu0 0.0
      %662 = vmatpush1.msra.mxu0 %v631
      %663 = vmatprep.subr.mxu0 0.0
      %664 = vmatpush1.msra.mxu0 %v632
      %665 = vmatprep.subr.mxu0 0.0
      %666 = vmatpush1.msra.mxu0 0.0
      %667 = vmatprep.subr.mxu0 0.0
      %668 = vmatpush1.msra.mxu0 0.0
      %669 = vmatprep.subr.mxu0 0.0
      %670 = vmatpush1.msra.mxu0 0.0
      %671 = vmatprep.subr.mxu0 0.0
      %672 = vmatpush1.msra.mxu0 0.0
      %673 = vmatprep.subr.mxu0 0.0
      %674 = vmatpush1.msra.mxu0 0.0
      %675 = vmatprep.subr.mxu0 0.0
      %676 = vmatpush1.msra.mxu0 0.0
      %677 = vmatprep.subr.mxu0 0.0
      %678 = vmatpush1.msra.mxu0 0.0
      %679 = vmatprep.subr.mxu0 0.0
      %680 = vmatpush1.msra.mxu0 0.0
      %681 = vmatprep.subr.mxu0 0.0
      %682 = vmatpush1.msra.mxu0 0.0
      %683 = vmatprep.subr.mxu0 0.0
      %684 = vmatpush1.msra.mxu0 0.0
      %685 = vmatprep.subr.mxu0 0.0
      %686 = vmatpush1.msra.mxu0 0.0
      %687 = vmatprep.subr.mxu0 0.0
      %688 = vmatpush1.msra.mxu0 0.0
      %689 = vmatprep.subr.mxu0 0.0
      %690 = vmatpush1.msra.mxu0 0.0
      %691 = vmatprep.subr.mxu0 0.0
      %692 = vmatpush1.msra.mxu0 0.0
      %693 = vmatprep.subr.mxu0 0.0
      %694 = vmatpush1.msra.mxu0 0.0
      %695 = vmatprep.subr.mxu0 0.0
      %696 = vmatpush1.msra.mxu0 0.0
      %697 = vmatprep.mubr.f32.mxu0 0.0
      %698 = vmatmul.mubr.f32.gmra.mrb[0].mxu0 %v613
      %v699 = vpop.f32.mrb[0].mxu0
      %v700 = vadd.f32 0.0, %v699
      %v701 = vpop.f32.mrb[0].mxu0
      %702 = vmatprep.mubr.f32.mxu0 0.0
      %703 = vmatmul.mubr.f32.gmra.mrb[0].mxu0 %v614
      %v704 = vpop.f32.mrb[0].mxu0
      %v705 = vadd.f32 0.0, %v704
      %v706 = vpop.f32.mrb[0].mxu0
      %707 = vmatprep.mubr.f32.mxu0 0.0
      %708 = vmatmul.mubr.f32.gmra.mrb[0].mxu0 %v615
      %v709 = vpop.f32.mrb[0].mxu0
      %v710 = vadd.f32 0.0, %v709
      %v711 = vpop.f32.mrb[0].mxu0
      %712 = vmatprep.mubr.f32.mxu0 0.0
      %713 = vmatmul.mubr.f32.gmra.mrb[0].mxu0 %v616
      %v714 = vpop.f32.mrb[0].mxu0
      %v715 = vadd.f32 0.0, %v714
      %v716 = vpop.f32.mrb[0].mxu0
      %717 = vdwg.mxu0
      %v718 = vmul.f32 %v613, %v613
      %v719 = vmul.f32 %v614, %v614
      %v720 = vmul.f32 %v615, %v615
      %v721 = vmul.f32 %v616, %v616
      %722 = vmatprep.subr.mxu0 0.0
      %723 = vmatpush1.msra.mxu0 %v617
      %724 = vmatprep.subr.mxu0 0.0
      %725 = vmatpush1.msra.mxu0 %v618
      %726 = vmatprep.subr.mxu0 0.0
      %727 = vmatpush1.msra.mxu0 %v619
      %728 = vmatprep.subr.mxu0 0.0
      %729 = vmatpush1.msra.mxu0 %v620
      %730 = vmatprep.subr.mxu0 0.0
      %731 = vmatpush1.msra.mxu0 %v621
      %732 = vmatprep.subr.mxu0 0.0
      %733 = vmatpush1.msra.mxu0 %v622
      %734 = vmatprep.subr.mxu0 0.0
      %735 = vmatpush1.msra.mxu0 %v623
      %736 = vmatprep.subr.mxu0 0.0
      %737 = vmatpush1.msra.mxu0 %v624
      %738 = vmatprep.subr.mxu0 0.0
      %739 = vmatpush1.msra.mxu0 %v625
      %740 = vmatprep.subr.mxu0 0.0
      %741 = vmatpush1.msra.mxu0 %v626
      %742 = vmatprep.subr.mxu0 0.0
      %743 = vmatpush1.msra.mxu0 %v627
      %744 = vmatprep.subr.mxu0 0.0
      %745 = vmatpush1.msra.mxu0 %v628
      %746 = vmatprep.subr.mxu0 0.0
      %747 = vmatpush1.msra.mxu0 %v629
      %748 = vmatprep.subr.mxu0 0.0
      %749 = vmatpush1.msra.mxu0 %v630
      %750 = vmatprep.subr.mxu0 0.0
      %751 = vmatpush1.msra.mxu0 %v631
      %752 = vmatprep.subr.mxu0 0.0
      %753 = vmatpush1.msra.mxu0 %v632
      %754 = vmatprep.subr.mxu0 0.0
      %755 = vmatpush1.msra.mxu0 0.0
      %756 = vmatprep.subr.mxu0 0.0
      %757 = vmatpush1.msra.mxu0 0.0
      %758 = vmatprep.subr.mxu0 0.0
      %759 = vmatpush1.msra.mxu0 0.0
      %760 = vmatprep.subr.mxu0 0.0
      %761 = vmatpush1.msra.mxu0 0.0
      %762 = vmatprep.subr.mxu0 0.0
      %763 = vmatpush1.msra.mxu0 0.0
      %764 = vmatprep.subr.mxu0 0.0
      %765 = vmatpush1.msra.mxu0 0.0
      %766 = vmatprep.subr.mxu0 0.0
      %767 = vmatpush1.msra.mxu0 0.0
      %768 = vmatprep.subr.mxu0 0.0
      %769 = vmatpush1.msra.mxu0 0.0
      %770 = vmatprep.subr.mxu0 0.0
      %771 = vmatpush1.msra.mxu0 0.0
      %772 = vmatprep.subr.mxu0 0.0
      %773 = vmatpush1.msra.mxu0 0.0
      %774 = vmatprep.subr.mxu0 0.0
      %775 = vmatpush1.msra.mxu0 0.0
      %776 = vmatprep.subr.mxu0 0.0
      %777 = vmatpush1.msra.mxu0 0.0
      %778 = vmatprep.subr.mxu0 0.0
      %779 = vmatpush1.msra.mxu0 0.0
      %780 = vmatprep.subr.mxu0 0.0
      %781 = vmatpush1.msra.mxu0 0.0
      %782 = vmatprep.subr.mxu0 0.0
      %783 = vmatpush1.msra.mxu0 0.0
      %784 = vmatprep.subr.mxu0 0.0
      %785 = vmatpush1.msra.mxu0 0.0
      %786 = vmatprep.mubr.f32.mxu0 0.0
      %787 = vmatmul.mubr.f32.gmra.mrb[0].mxu0 %v718
      %v788 = vpop.f32.mrb[0].mxu0
      %v789 = vadd.f32 0.0, %v788
      %v790 = vpop.f32.mrb[0].mxu0
      %791 = vmatprep.mubr.f32.mxu0 0.0
      %792 = vmatmul.mubr.f32.gmra.mrb[0].mxu0 %v719
      %v793 = vpop.f32.mrb[0].mxu0
      %v794 = vadd.f32 0.0, %v793
      %v795 = vpop.f32.mrb[0].mxu0
      %796 = vmatprep.mubr.f32.mxu0 0.0
      %797 = vmatmul.mubr.f32.gmra.mrb[0].mxu0 %v720
      %v798 = vpop.f32.mrb[0].mxu0
      %v799 = vadd.f32 0.0, %v798
      %v800 = vpop.f32.mrb[0].mxu0
      %801 = vmatprep.mubr.f32.mxu0 0.0
      %802 = vmatmul.mubr.f32.gmra.mrb[0].mxu0 %v721
      %v803 = vpop.f32.mrb[0].mxu0
      %v804 = vadd.f32 0.0, %v803
      %v805 = vpop.f32.mrb[0].mxu0
      %806 = vdwg.mxu0
      %v807 = vmul.f32 %v700, %v700
      %v808 = vmul.f32 %v705, %v705
      %v809 = vmul.f32 %v710, %v710
      %v810 = vmul.f32 %v715, %v715
      %v811 = vsub.f32 %v789, %v807
      %v812 = vsub.f32 %v794, %v808
      %v813 = vsub.f32 %v799, %v809
      %v814 = vsub.f32 %v804, %v810
      %v815 = vsub.f32 %v613, %v700
      %v816 = vsub.f32 %v614, %v705
      %v817 = vsub.f32 %v615, %v710
      %v818 = vsub.f32 %v616, %v715
      %v819 = vadd.f32 %v811, 1e-05
      %v820 = vadd.f32 %v812, 1e-05
      %v821 = vadd.f32 %v813, 1e-05
      %v822 = vadd.f32 %v814, 1e-05
      %v823 = vrsqrt.pop %v819
      %v824 = vrsqrt.pop %v820
      %v825 = vrsqrt.pop %v821
      %v826 = vrsqrt.pop %v822
      %v827 = vmul.f32 %v815, %v823
      %v828 = vmul.f32 %v816, %v824
      %v829 = vmul.f32 %v817, %v825
      %v830 = vmul.f32 %v818, %v826
      %v831 = vld [vmem:[%s6] sm:$0x1]
      %v833 = vlaneseq
      %v834 = vshrl.u32 %v833, 7
      %v835 = vsub.s32 0, %v834
      %v836 = vrot.slane %v831, %v835
      %v838 = vmul.f32 %v827, %v836
      %v839 = vmul.f32 %v828, %v836
      %v840 = vmul.f32 %v829, %v836
      %v841 = vmul.f32 %v830, %v836
      %v842 = vld [vmem:[%s7] sm:$0x1]
      %v844 = vlaneseq
      %v845 = vshrl.u32 %v844, 7
      %v846 = vsub.s32 0, %v845
      %v847 = vrot.slane %v842, %v846
      %v849 = vadd.f32 %v838, %v847
      %v850 = vadd.f32 %v839, %v847
      %v851 = vadd.f32 %v840, %v847
      %v852 = vadd.f32 %v841, %v847
      %vm853 = vcmp.gt.f32.partialorder %v849, 20.0
      %vm854 = vcmp.gt.f32.partialorder %v850, 20.0
      %vm855 = vcmp.gt.f32.partialorder %v851, 20.0
      %vm856 = vcmp.gt.f32.partialorder %v852, 20.0
      %v857 = vmin.f32 %v849, 20.0
      %v858 = vmin.f32 %v850, 20.0
      %v859 = vmin.f32 %v851, 20.0
      %v860 = vmin.f32 %v852, 20.0
      %v861 = vmul.f32 %v857, 1.442695
      %v862 = vpow.pop %v861
      %v863 = vmul.f32 %v858, 1.442695
      %v864 = vpow.pop %v863
      %v865 = vmul.f32 %v859, 1.442695
      %v866 = vpow.pop %v865
      %v867 = vmul.f32 %v860, 1.442695
      %v868 = vpow.pop %v867
      %v869 = vadd.f32 %v862, 1.0
      %v870 = vlog2.pop %v869
      %v871 = vmul.f32 %v870, 0.6931472
      %v872 = vmul.f32 -0.5, %v862
      %v873 = vadd.f32 %v872, 1.0
      %v874 = vmul.f32 %v873, %v862
      %v875 = vand.u32 2147483647, %v862
      %vm876 = vcmp.lt.f32.partialorder %v875, 0.0004427343
      %v877 = vsel %vm876, %v874, %v871
      %v878 = vadd.f32 %v864, 1.0
      %v879 = vlog2.pop %v878
      %v880 = vmul.f32 %v879, 0.6931472
      %v881 = vmul.f32 -0.5, %v864
      %v882 = vadd.f32 %v881, 1.0
      %v883 = vmul.f32 %v882, %v864
      %v884 = vand.u32 2147483647, %v864
      %vm885 = vcmp.lt.f32.partialorder %v884, 0.0004427343
      %v886 = vsel %vm885, %v883, %v880
      %v887 = vadd.f32 %v866, 1.0
      %v888 = vlog2.pop %v887
      %v889 = vmul.f32 %v888, 0.6931472
      %v890 = vmul.f32 -0.5, %v866
      %v891 = vadd.f32 %v890, 1.0
      %v892 = vmul.f32 %v891, %v866
      %v893 = vand.u32 2147483647, %v866
      %vm894 = vcmp.lt.f32.partialorder %v893, 0.0004427343
      %v895 = vsel %vm894, %v892, %v889
      %v896 = vadd.f32 %v868, 1.0
      %v897 = vlog2.pop %v896
      %v898 = vmul.f32 %v897, 0.6931472
      %v899 = vmul.f32 -0.5, %v868
      %v900 = vadd.f32 %v899, 1.0
      %v901 = vmul.f32 %v900, %v868
      %v902 = vand.u32 2147483647, %v868
      %vm903 = vcmp.lt.f32.partialorder %v902, 0.0004427343
      %v904 = vsel %vm903, %v901, %v898
      %v905 = vsel %vm853, %v849, %v877
      %v906 = vsel %vm854, %v850, %v886
      %v907 = vsel %vm855, %v851, %v895
      %v908 = vsel %vm856, %v852, %v904
      %909 = vst [vmem:[%s351] sm:$0xff] %v905
      %910 = vst [vmem:[%s351 + $0x8] sm:$0xff] %v906
      %911 = vst [vmem:[%s351 + $0x10] sm:$0xff] %v907
      %912 = vst [vmem:[%s351 + $0x18] sm:$0xff] %v908
      %s913 = smul.u32 4, %s19
      %p914 = scmp.lt.s32.totalorder %s913, 7
      %s915 = scalar_select %p914, %s913, 7
      %s916 = smul.addr %s915, 8
      %s917 = scalar_lea.vmem %s8, %s916
      // Predicated region
      $region53: #{conv_angle_pallas.1} parent=51 // pred_check
        %p918 = pneg %p220
      $region54: #{conv_angle_pallas.1} parent=51 // pred_check_branch
        %920 = sbr.rel (%p918) target = $region56
      $region55: #{conv_angle_pallas.1} parent=51 // pred_region
        %s921 = smul.u32 4, %s19
      $region56: #{conv_angle_pallas.1} parent=51 // pred_fallthru
        _
    $region52: #{conv_angle_pallas.1} parent=5 // pred_fallthru
      _
    %p922 = scmp.le.s32.totalorder 2, %s14
    // Predicated region
    $region57: #{conv_angle_pallas.1} parent=5 // pred_check
      %p923 = pneg %p922
    $region58: #{conv_angle_pallas.1} parent=5 // pred_check_branch
      %925 = sbr.rel (%p923) target = $region60
    $region59: #{conv_angle_pallas.1} parent=5 // pred_region
      %s926 = ssub.s32 %s14, 2
      // Predicated region
      $region61: #{conv_angle_pallas.1} parent=59 // pred_check
        %p927 = pneg %p226
      $region62: #{conv_angle_pallas.1} parent=59 // pred_check_branch
        %929 = sbr.rel (%p927) target = $region64
      $region63: #{conv_angle_pallas.1} parent=59 // pred_region
        %s930 = smul.u32 4, %s20
        %p931 = scmp.lt.s32.totalorder %s930, 7
        %s932 = scalar_select %p931, %s930, 7
        %s933 = smul.addr %s932, 8
        %s934 = scalar_lea.vmem %s8, %s933
      $region64: #{conv_angle_pallas.1} parent=59 // pred_fallthru
        _
    $region60: #{conv_angle_pallas.1} parent=5 // pred_fallthru
      _
  $region6: #{conv_angle_pallas.1} parent=0 // loop_footer
    %s18 = sadd.s32 1, %s14
  $region7: #{conv_angle_pallas.1} parent=0 // loop_footer_branch
    %13 = sbr.rel target = $region3
  $region8: #{conv_angle_pallas.1} parent=0 // loop_exit
    _

</llo_original>
